<compile_context>
chip_gen: v6e
topology: v6e:2x2x1
jax: 0.10.0
libtpu: 0.0.40
codegen_flags: <defaults>
</compile_context>

<pallas_src>
import math

import jax
import jax.numpy as jnp
from jax.experimental import pallas as pl
from jax.experimental.pallas import tpu as pltpu


def _round_up(x, m):
    return ((x + m - 1) // m) * m


def _pad_last(x, target):
    pad = target - x.shape[-1]
    if pad == 0:
        return x
    return jnp.pad(x, [(0, 0)] * (x.ndim - 1) + [(0, pad)])


def _dpa_kernel(img_ref, w_ref, b_ref, v_ref, bl_ref, out_ref):
    # img_ref : (TB, L, D_img)        bf16 image tile
    # w_ref   : (D_img, 4*H_pad)      bf16 packed weights, cols [fc0|fc1|gate0|gate1]
    # b_ref   : (1, 4*H_pad)          f32 packed biases (same column layout)
    # v_ref   : (TB, 1, 2*H_pad)      f32 folded question vectors, cols [v0|v1]
    # bl_ref  : (1, 1)                f32 lc bias sum (constant over locations)
    # out_ref : (TB, L, D_img)
    tb, L, d_img = img_ref.shape
    two_h = v_ref.shape[-1]                       # 2 * H_pad

    # One fused MXU matmul for both branches' fc + gate projections.
    img = img_ref[...].reshape(tb * L, d_img)
    pre = jnp.dot(img, w_ref[...], preferred_element_type=jnp.float32)
    pre = pre + b_ref[...]                        # (TB*L, 4*H_pad), f32

    # Gated tanh for both branches in one pass (lane-aligned static slices).
    # Padded H columns give tanh(0)*sigmoid(0) = 0, so they contribute nothing.
    fa = jnp.tanh(pre[:, :two_h]) * jax.nn.sigmoid(pre[:, two_h:])   # (TB*L, 2*H_pad)
    fa = fa.reshape(tb, L, two_h)

    # lc fold: raw = sum_h image_fa_h @ (q_fa_h ⊙ wl_h) + (bl_0 + bl_1)
    raw = jnp.sum(fa * v_ref[...], axis=-1) + bl_ref[...]            # (TB, L)

    # softmax over the location axis (lane axis here)
    m = jnp.max(raw, axis=-1, keepdims=True)
    e = jnp.exp(raw - m)
    s = jnp.sum(e, axis=-1, keepdims=True)
    attn = e * pl.reciprocal(s, approx=True)                          # (TB, L)

    # expand_as(image_feat)
    out_ref[...] = jnp.broadcast_to(attn[:, :, None], (tb, L, d_img)).astype(out_ref.dtype)


def double_project_attention(image_feat, question_embedding, params,
                             *, compute_dtype=jnp.bfloat16, tb=None):
    B, L, d_img = image_feat.shape
    H = params["wi_fc"].shape[-1]
    h_pad = _round_up(H, 128)

    # ---- one-time packing in XLA (outside the grid) ----
    # image-branch weights: columns [fc0 | fc1 | gate0 | gate1], each H_pad wide
    w_cat = jnp.concatenate(
        [_pad_last(params["wi_fc"][0], h_pad), _pad_last(params["wi_fc"][1], h_pad),
         _pad_last(params["wi_gate"][0], h_pad), _pad_last(params["wi_gate"][1], h_pad)],
        axis=-1).astype(compute_dtype)                                  # (D_img, 4*H_pad)
    b_cat = jnp.concatenate(
        [_pad_last(params["bi_fc"][0], h_pad), _pad_last(params["bi_fc"][1], h_pad),
         _pad_last(params["bi_gate"][0], h_pad), _pad_last(params["bi_gate"][1], h_pad)],
        axis=-1).astype(jnp.float32)                                    # (1, 4*H_pad)

    # question branch hoisted out of the per-batch grid + lc-weight fold
    q = question_embedding.astype(jnp.float32)
    vs = []
    for h in range(2):
        q_fa = (jnp.tanh(q @ params["wt_fc"][h] + params["bt_fc"][h][0])
                * jax.nn.sigmoid(q @ params["wt_gate"][h] + params["bt_gate"][h][0]))  # (B, H)
        vs.append(_pad_last(q_fa * params["wl"][h][:, 0][None, :], h_pad))
    v_cat = jnp.concatenate(vs, axis=-1)[:, None, :].astype(jnp.float32)  # (B, 1, 2*H_pad)

    bl_sum = (params["bl"][0] + params["bl"][1]).reshape(1, 1).astype(jnp.float32)

    img_in = image_feat.astype(compute_dtype)

    # ---- batch blocking: amortize grid overhead, raise matmul M to TB*L ----
    if tb is None:
        tb = math.gcd(B, max(1, 256 // max(L, 1)))
    assert B % tb == 0, "batch block must divide the batch"
    grid = (B // tb,)

    in_specs = [
        pl.BlockSpec((tb, L, d_img), lambda b: (b, 0, 0)),      # image tile
        pl.BlockSpec((d_img, 4 * h_pad), lambda b: (0, 0)),     # packed weights (grid-invariant)
        pl.BlockSpec((1, 4 * h_pad), lambda b: (0, 0)),         # packed biases
        pl.BlockSpec((tb, 1, 2 * h_pad), lambda b: (b, 0, 0)),  # folded question vectors
        pl.BlockSpec((1, 1), lambda b: (0, 0)),                 # lc bias sum
    ]
    out_specs = pl.BlockSpec((tb, L, d_img), lambda b: (b, 0, 0))

    return pl.pallas_call(
        _dpa_kernel,
        out_shape=jax.ShapeDtypeStruct((B, L, d_img), image_feat.dtype),
        grid_spec=pltpu.PrefetchScalarGridSpec(
            num_scalar_prefetch=0,
            grid=grid,
            in_specs=in_specs,
            out_specs=out_specs,
        ),
        compiler_params=pltpu.CompilerParams(dimension_semantics=("parallel",)),
    )(img_in, w_cat, b_cat, v_cat, bl_sum)


def init_params(key, d_img, d_txt, hidden):
    """Deterministic synthetic parameters; leading dim 2 = (att1, att2)."""
    ks = jax.random.split(key, 10)
    scale = 0.1
    return {
        "wi_fc":   scale * jax.random.normal(ks[0], (2, d_img, hidden), jnp.float32),
        "bi_fc":   scale * jax.random.normal(ks[1], (2, 1, hidden), jnp.float32),
        "wi_gate": scale * jax.random.normal(ks[2], (2, d_img, hidden), jnp.float32),
        "bi_gate": scale * jax.random.normal(ks[3], (2, 1, hidden), jnp.float32),
        "wt_fc":   scale * jax.random.normal(ks[4], (2, d_txt, hidden), jnp.float32),
        "bt_fc":   scale * jax.random.normal(ks[5], (2, 1, hidden), jnp.float32),
        "wt_gate": scale * jax.random.normal(ks[6], (2, d_txt, hidden), jnp.float32),
        "bt_gate": scale * jax.random.normal(ks[7], (2, 1, hidden), jnp.float32),
        "wl":      scale * jax.random.normal(ks[8], (2, hidden, 1), jnp.float32),
        "bl":      scale * jax.random.normal(ks[9], (2, 1, 1), jnp.float32),
    }


def _reference(image_feat, question_embedding, params):
    """Pure-JAX f32 reference matching the PyTorch forward (eval mode)."""
    def gated_tanh(x, w_fc, b_fc, w_gate, b_gate):
        return jnp.tanh(x @ w_fc + b_fc) * jax.nn.sigmoid(x @ w_gate + b_gate)

    raw = 0.0
    for h in range(2):
        img_fa = gated_tanh(image_feat, params["wi_fc"][h], params["bi_fc"][h][0],
                            params["wi_gate"][h], params["bi_gate"][h][0])      # (B, L, H)
        q_fa = gated_tanh(question_embedding, params["wt_fc"][h], params["bt_fc"][h][0],
                          params["wt_gate"][h], params["bt_gate"][h][0])        # (B, H)
        joint = img_fa * q_fa[:, None, :]
        raw = raw + joint @ params["wl"][h] + params["bl"][h][0]                # (B, L, 1)
    attn = jax.nn.softmax(raw, axis=1)
    return jnp.broadcast_to(attn, image_feat.shape)


if __name__ == "__main__":
    B, L, D_IMG, D_TXT, HIDDEN = 2, 8, 16, 32, 32

    key = jax.random.PRNGKey(0)
    k_img, k_txt, k_par = jax.random.split(key, 3)

    image_feat = jax.random.normal(k_img, (B, L, D_IMG), jnp.float32)
    question_embedding = jax.random.normal(k_txt, (B, D_TXT), jnp.float32)
    params = init_params(k_par, D_IMG, D_TXT, HIDDEN)

    out = double_project_attention(image_feat, question_embedding, params)
    out = jax.block_until_ready(out)

    ref = _reference(image_feat, question_embedding, params)
    assert out.shape == (B, L, D_IMG)
    # bf16 MXU operands + approx reciprocal -> compare at relaxed tolerance.
    assert jnp.allclose(out, ref, atol=2e-2, rtol=2e-2), "mismatch vs pure-JAX reference"

    print("KERNEL_OK")
</pallas_src>

<mosaic_0001>
module attributes {stable_mosaic.version = 11 : i64} {
  func.func @_dpa_kernel(%arg0: i32, %arg1: memref<2x8x16xbf16, #tpu.memory_space<vmem>>, %arg2: memref<16x512xbf16, #tpu.memory_space<vmem>>, %arg3: memref<1x512xf32, #tpu.memory_space<vmem>>, %arg4: memref<2x1x256xf32, #tpu.memory_space<vmem>>, %arg5: memref<1x1xf32, #tpu.memory_space<vmem>>, %arg6: memref<2x8x16xf32, #tpu.memory_space<vmem>>) attributes {dimension_semantics = [#tpu.dimension_semantics<parallel>], iteration_bounds = array<i64: 1>, scalar_prefetch = 0 : i64, scratch_operands = 0 : i64, tpu.core_type = #tpu.core_type<tc>, window_params = [{transform_indices = @transform_0, window_bounds = array<i64: 2, 8, 16>}, {pipeline_mode = #tpu.pipeline_mode<synchronous>, transform_indices = @transform_1, window_bounds = array<i64: 16, 512>}, {pipeline_mode = #tpu.pipeline_mode<synchronous>, transform_indices = @transform_2, window_bounds = array<i64: 1, 512>}, {transform_indices = @transform_3, window_bounds = array<i64: 2, 1, 256>}, {pipeline_mode = #tpu.pipeline_mode<synchronous>, transform_indices = @transform_4, window_bounds = array<i64: 1, 1>}, {transform_indices = @transform_5, window_bounds = array<i64: 2, 8, 16>}]} {
    %c0 = arith.constant 0 : index
    %c0_0 = arith.constant 0 : index
    %c0_1 = arith.constant 0 : index
    %0 = vector.load %arg1[%c0, %c0_0, %c0_1] : memref<2x8x16xbf16, #tpu.memory_space<vmem>>, vector<2x8x16xbf16>
    %1 = vector.shape_cast %0 : vector<2x8x16xbf16> to vector<16x16xbf16>
    %c0_2 = arith.constant 0 : index
    %c0_3 = arith.constant 0 : index
    %2 = vector.load %arg2[%c0_2, %c0_3] : memref<16x512xbf16, #tpu.memory_space<vmem>>, vector<16x512xbf16>
    %cst = arith.constant dense<0.000000e+00> : vector<16x512xf32>
    %3 = tpu.matmul %1, %2, %cst {dimension_numbers = #tpu.dot_dimension_numbers<[1], [0], [0], [1], [0, 0, 1, 1], [], []>} : vector<16x16xbf16>, vector<16x512xbf16>, vector<16x512xf32> -> vector<16x512xf32>
    %c0_4 = arith.constant 0 : index
    %c0_5 = arith.constant 0 : index
    %4 = vector.load %arg3[%c0_4, %c0_5] : memref<1x512xf32, #tpu.memory_space<vmem>>, vector<1x512xf32>
    %5 = vector.broadcast %4 : vector<1x512xf32> to vector<16x512xf32>
    %6 = arith.addf %3, %5 : vector<16x512xf32>
    %7 = vector.extract_strided_slice %6 {offsets = [0, 0], sizes = [16, 256], strides = [1, 1]} : vector<16x512xf32> to vector<16x256xf32>
    %8 = math.tanh %7 : vector<16x256xf32>
    %9 = vector.extract_strided_slice %6 {offsets = [0, 256], sizes = [16, 256], strides = [1, 1]} : vector<16x512xf32> to vector<16x256xf32>
    %10 = arith.negf %9 : vector<16x256xf32>
    %11 = math.exp %10 : vector<16x256xf32>
    %cst_6 = arith.constant 1.000000e+00 : f32
    %12 = vector.broadcast %cst_6 : f32 to vector<16x256xf32>
    %13 = arith.addf %12, %11 : vector<16x256xf32>
    %14 = arith.divf %12, %13 : vector<16x256xf32>
    %15 = arith.mulf %8, %14 : vector<16x256xf32>
    %16 = vector.shape_cast %15 : vector<16x256xf32> to vector<2x8x256xf32>
    %c0_7 = arith.constant 0 : index
    %c0_8 = arith.constant 0 : index
    %c0_9 = arith.constant 0 : index
    %17 = vector.load %arg4[%c0_7, %c0_8, %c0_9] : memref<2x1x256xf32, #tpu.memory_space<vmem>>, vector<2x1x256xf32>
    %18 = vector.broadcast %17 : vector<2x1x256xf32> to vector<2x8x256xf32>
    %19 = arith.mulf %16, %18 : vector<2x8x256xf32>
    %cst_10 = arith.constant dense<0.000000e+00> : vector<2x8xf32>
    %20 = vector.multi_reduction <add>, %19, %cst_10 [2] : vector<2x8x256xf32> to vector<2x8xf32>
    %c0_11 = arith.constant 0 : index
    %c0_12 = arith.constant 0 : index
    %21 = vector.load %arg5[%c0_11, %c0_12] : memref<1x1xf32, #tpu.memory_space<vmem>>, vector<1x1xf32>
    %22 = vector.broadcast %21 : vector<1x1xf32> to vector<2x8xf32>
    %23 = arith.addf %20, %22 : vector<2x8xf32>
    %cst_13 = arith.constant dense<0xFF800000> : vector<2xf32>
    %24 = vector.multi_reduction <maximumf>, %23, %cst_13 [1] : vector<2x8xf32> to vector<2xf32>
    %25 = vector.shape_cast %24 : vector<2xf32> to vector<2x1xf32>
    %26 = vector.broadcast %25 : vector<2x1xf32> to vector<2x8xf32>
    %27 = arith.subf %23, %26 : vector<2x8xf32>
    %28 = math.exp %27 : vector<2x8xf32>
    %cst_14 = arith.constant dense<0.000000e+00> : vector<2xf32>
    %29 = vector.multi_reduction <add>, %28, %cst_14 [1] : vector<2x8xf32> to vector<2xf32>
    %30 = vector.shape_cast %29 : vector<2xf32> to vector<2x1xf32>
    %31 = tpu.reciprocal %30 {approx = true} : vector<2x1xf32> -> vector<2x1xf32>
    %32 = vector.broadcast %31 : vector<2x1xf32> to vector<2x8xf32>
    %33 = arith.mulf %28, %32 : vector<2x8xf32>
    %34 = vector.shape_cast %33 : vector<2x8xf32> to vector<2x8x1xf32>
    %35 = vector.shape_cast %34 : vector<2x8x1xf32> to vector<2x8x1xf32>
    %36 = vector.broadcast %35 : vector<2x8x1xf32> to vector<2x8x16xf32>
    %c0_15 = arith.constant 0 : index
    %c0_16 = arith.constant 0 : index
    %c0_17 = arith.constant 0 : index
    %37 = vector.load %arg6[%c0_15, %c0_16, %c0_17] : memref<2x8x16xf32, #tpu.memory_space<vmem>>, vector<2x8x16xf32>
    tpu.vector_store %arg6[%c0_15, %c0_16, %c0_17], %36 {strides = array<i32>} : memref<2x8x16xf32, #tpu.memory_space<vmem>>, vector<2x8x16xf32>,
    return
  }
  func.func @transform_0(%arg0: i32) -> (i32, i32, i32) {
    %c0_i32 = arith.constant 0 : i32
    %c0_i32_0 = arith.constant 0 : i32
    %c0_i32_1 = arith.constant 0 : i32
    return %arg0, %c0_i32, %c0_i32_0 : i32, i32, i32
  }
  func.func @transform_1(%arg0: i32) -> (i32, i32) {
    %c0_i32 = arith.constant 0 : i32
    %c0_i32_0 = arith.constant 0 : i32
    %c0_i32_1 = arith.constant 0 : i32
    return %c0_i32, %c0_i32_0 : i32, i32
  }
  func.func @transform_2(%arg0: i32) -> (i32, i32) {
    %c0_i32 = arith.constant 0 : i32
    %c0_i32_0 = arith.constant 0 : i32
    %c0_i32_1 = arith.constant 0 : i32
    return %c0_i32, %c0_i32_0 : i32, i32
  }
  func.func @transform_3(%arg0: i32) -> (i32, i32, i32) {
    %c0_i32 = arith.constant 0 : i32
    %c0_i32_0 = arith.constant 0 : i32
    %c0_i32_1 = arith.constant 0 : i32
    return %arg0, %c0_i32, %c0_i32_0 : i32, i32, i32
  }
  func.func @transform_4(%arg0: i32) -> (i32, i32) {
    %c0_i32 = arith.constant 0 : i32
    %c0_i32_0 = arith.constant 0 : i32
    %c0_i32_1 = arith.constant 0 : i32
    return %c0_i32, %c0_i32_0 : i32, i32
  }
  func.func @transform_5(%arg0: i32) -> (i32, i32, i32) {
    %c0_i32 = arith.constant 0 : i32
    %c0_i32_0 = arith.constant 0 : i32
    %c0_i32_1 = arith.constant 0 : i32
    return %arg0, %c0_i32, %c0_i32_0 : i32, i32, i32
  }
}

</mosaic_0001>

<llo_original>
// kernel: tpu_custom_call.1
$region0: #{tpu_custom_call.1}
  #allocation0 [shape = 'u32[]', space=smem, size = 0x4, offset = 0x4, fixed_abs, tag = 'smem constant byte address 0x4 - core index']
  #allocation1 [shape = 'u32[144,128]{1,0:T(1,128)}', space=vmem, size = 0x12000, scoped, tag = 'internal scratch']
  #allocation2 [shape = 'f32[1,1]{1,0:T(1,128)S(1)}', space=vmem, size = 0x200, scoped, tag = 'scoped memory for tpu_custom_call.1']
  %s0 = inlined_call_operand.hbm [shape: bf16[2,8,16], index: 0, kind: input, shape index: {}]
  %s1 = inlined_call_operand.hbm [shape: bf16[16,512], index: 1, kind: input, shape index: {}]
  %s2 = inlined_call_operand.vmem [shape: f32[1,512], index: 2, kind: input, shape index: {}]
  %s3 = inlined_call_operand.hbm [shape: f32[2,1,256], index: 3, kind: input, shape index: {}]
  %s4 = inlined_call_operand.<no memory space> [shape: f32[1,1], index: 4, kind: input, shape index: {}]
  %s5 = inlined_call_operand.hbm [shape: f32[2,8,16], index: 5, kind: output, shape index: {}]
  %s6 = sld [smem:[#allocation0]]
  $region42: #{tpu_custom_call.1} parent=0
    _
  %s8 = ssub.s32 1, %s6
  %s9 = scalar_select 0, %s8, %s6
  %v10 = vstv %s4
  %11 = vst [vmem:[#allocation2] sm:$0x1] %v10
  $region1: #{tpu_custom_call.1} parent=0
    #allocation3 [shape = 'u8[4096]{0}', space=vmem, size = 0x1000, scoped, tag = 'input window, operand 0, single buffered']
    #allocation4 [shape = 's32[1]{0}', space=sflag, size = 0x4, scoped, tag = 'scoped memory for tpu_custom_call.1']
    #allocation5 [shape = 's32[1]{0}', space=sflag, size = 0x4, scoped, tag = 'scoped memory for tpu_custom_call.1']
    #allocation6 [shape = 'u8[16384]{0}', space=vmem, size = 0x4000, scoped, tag = 'input window, operand 1, single buffered']
    #allocation7 [shape = 's32[1]{0}', space=sflag, size = 0x4, scoped, tag = 'scoped memory for tpu_custom_call.1']
    #allocation8 [shape = 'u8[2048]{0}', space=vmem, size = 0x800, scoped, tag = 'input window, operand 3, single buffered']
    #allocation9 [shape = 'u8[8192]{0}', space=vmem, size = 0x2000, scoped, tag = 'output window, operand 0, single buffered']
    %12 = vsyncpa [#allocation4], 0
    %13 = vsyncpa [#allocation7], 0
    %14 = vsyncpa [#allocation5], 0
    // Predicated region
    $region2: #{tpu_custom_call.1} parent=1 // pred_check
      _
    $region3: #{tpu_custom_call.1} parent=1 // pred_check_branch
      %16 = sbr.rel (0) target = $region5
    $region4: #{tpu_custom_call.1} parent=1 // pred_region
      %s18 = ssub.s32 128, 128
      %19 = vsyncadd [#allocation4], %s18
      %s20 = sshll.u32 [#allocation3], 4
      %s21 = int_to_ptr.vmem [resolvable:$true] %s20
      %26 = dma.hbm_to_vmem [thread:$0]  %s0, 128, %s21, [#allocation4], 64, 64, 4
    $region5: #{tpu_custom_call.1} parent=1 // pred_fallthru
      _
    // Predicated region
    $region6: #{tpu_custom_call.1} parent=1 // pred_check
      _
    $region7: #{tpu_custom_call.1} parent=1 // pred_check_branch
      %28 = sbr.rel (0) target = $region9
    $region8: #{tpu_custom_call.1} parent=1 // pred_region
      %s30 = ssub.s32 512, 512
      %31 = vsyncadd [#allocation7], %s30
      %s32 = sshll.u32 [#allocation6], 4
      %s33 = int_to_ptr.vmem [resolvable:$true] %s32
      %38 = dma.hbm_to_vmem [thread:$0]  %s1, 512, %s33, [#allocation7], 256, 256, 16
    $region9: #{tpu_custom_call.1} parent=1 // pred_fallthru
      _
    // Predicated region
    $region10: #{tpu_custom_call.1} parent=1 // pred_check
      _
    $region11: #{tpu_custom_call.1} parent=1 // pred_check_branch
      %40 = sbr.rel (0) target = $region13
    $region12: #{tpu_custom_call.1} parent=1 // pred_region
      _
    $region13: #{tpu_custom_call.1} parent=1 // pred_fallthru
      _
    // Predicated region
    $region14: #{tpu_custom_call.1} parent=1 // pred_check
      _
    $region15: #{tpu_custom_call.1} parent=1 // pred_check_branch
      %42 = sbr.rel (0) target = $region17
    $region16: #{tpu_custom_call.1} parent=1 // pred_region
      %s44 = ssub.s32 64, 64
      %45 = vsyncadd [#allocation7], %s44
      %s46 = sshll.u32 [#allocation8], 4
      %s47 = int_to_ptr.vmem [resolvable:$true] %s46
      %52 = dma.hbm_to_vmem [thread:$0]  %s3, 64, %s47, [#allocation7], 32, 32, 2
    $region17: #{tpu_custom_call.1} parent=1 // pred_fallthru
      _
    // Predicated region
    $region18: #{tpu_custom_call.1} parent=1 // pred_check
      _
    $region19: #{tpu_custom_call.1} parent=1 // pred_check_branch
      %54 = sbr.rel (0) target = $region21
    $region20: #{tpu_custom_call.1} parent=1 // pred_region
      _
    $region21: #{tpu_custom_call.1} parent=1 // pred_fallthru
      _
    // Predicated region
    $region22: #{tpu_custom_call.1} parent=1 // pred_check
      _
    $region23: #{tpu_custom_call.1} parent=1 // pred_check_branch
      %56 = sbr.rel (0) target = $region25
    $region24: #{tpu_custom_call.1} parent=1 // pred_region
      %57 = dma.done [#allocation4], 128
    $region25: #{tpu_custom_call.1} parent=1 // pred_fallthru
      _
    // Predicated region
    $region26: #{tpu_custom_call.1} parent=1 // pred_check
      _
    $region27: #{tpu_custom_call.1} parent=1 // pred_check_branch
      %59 = sbr.rel (0) target = $region29
    $region28: #{tpu_custom_call.1} parent=1 // pred_region
      %60 = dma.done [#allocation7], 512
    $region29: #{tpu_custom_call.1} parent=1 // pred_fallthru
      _
    // Predicated region
    $region30: #{tpu_custom_call.1} parent=1 // pred_check
      _
    $region31: #{tpu_custom_call.1} parent=1 // pred_check_branch
      %62 = sbr.rel (0) target = $region33
    $region32: #{tpu_custom_call.1} parent=1 // pred_region
      %63 = dma.done [#allocation7], 64
    $region33: #{tpu_custom_call.1} parent=1 // pred_fallthru
      _
    %v65 = vld [vmem:[#allocation3] sm:$0xf]
    %v66 = vld [vmem:[#allocation3 + $0x4] sm:$0xf]
    %v67 = vld [vmem:[#allocation6] sm:$0xff]
    %v68 = vld [vmem:[#allocation6 + $0x8] sm:$0xff]
    %v69 = vld [vmem:[#allocation6 + $0x10] sm:$0xff]
    %v70 = vld [vmem:[#allocation6 + $0x18] sm:$0xff]
    %v71 = vld [vmem:[%s2] sm:$0xf]
    %v73 = vlaneseq
    %v74 = vshrl.u32 %v73, 7
    %v75 = vsub.s32 0, %v74
    %v76 = vrot.slane %v71, %v75
    %v77 = vlaneseq
    %v78 = vshrl.u32 %v77, 7
    %v79 = vsub.s32 1, %v78
    %v80 = vrot.slane %v71, %v79
    %v81 = vlaneseq
    %v82 = vshrl.u32 %v81, 7
    %v83 = vsub.s32 2, %v82
    %v84 = vrot.slane %v71, %v83
    %v85 = vlaneseq
    %v86 = vshrl.u32 %v85, 7
    %v87 = vsub.s32 3, %v86
    %v88 = vrot.slane %v71, %v87
    %v95 = vunpack.c.l.b16 %v65
    %v96 = vunpack.c.l.b16 %v66
    %v97 = vpack.c.b16 %v96, %v95
    %v102 = vunpack.c.l.b16 %v67
    %v103 = vunpack.c.h.b16 %v67
    %v104 = vunpack.c.l.b16 %v68
    %v105 = vunpack.c.h.b16 %v68
    %v106 = vunpack.c.l.b16 %v69
    %v107 = vunpack.c.h.b16 %v69
    %v108 = vunpack.c.l.b16 %v70
    %v109 = vunpack.c.h.b16 %v70
    %v110 = vpack.c.b16 %v106, %v102
    %v111 = vpack.c.b16 %v107, %v103
    %v112 = vpack.c.b16 %v108, %v104
    %v113 = vpack.c.b16 %v109, %v105
    %vm118 = vcmask 130048
    %v120 = vsel %vm118, %v97, 0
    %122 = vmatprep.subr.bf16.mxu0 0
    %123 = vmatpush1.bf16.msra.mxu0 0
    %124 = vmatprep.subr.bf16.mxu0 0
    %125 = vmatpush1.bf16.msra.mxu0 0
    %126 = vmatprep.subr.bf16.mxu0 0
    %127 = vmatpush1.bf16.msra.mxu0 0
    %128 = vmatprep.subr.bf16.mxu0 0
    %129 = vmatpush1.bf16.msra.mxu0 0
    %130 = vmatprep.subr.bf16.mxu0 0
    %131 = vmatpush1.bf16.msra.mxu0 0
    %132 = vmatprep.subr.bf16.mxu0 0
    %133 = vmatpush1.bf16.msra.mxu0 0
    %134 = vmatprep.subr.bf16.mxu0 0
    %135 = vmatpush1.bf16.msra.mxu0 0
    %136 = vmatprep.subr.bf16.mxu0 %v111
    %137 = vmatpush1.bf16.msra.mxu0 %v110
    %138 = vmatprep.subr.bf16.mxu0 0
    %139 = vmatpush2.bf16.msra.mxu0 0
    %140 = vmatprep.subr.bf16.mxu0 0
    %141 = vmatpush2.bf16.msra.mxu0 0
    %142 = vmatprep.subr.bf16.mxu0 0
    %143 = vmatpush2.bf16.msra.mxu0 0
    %144 = vmatprep.subr.bf16.mxu0 0
    %145 = vmatpush2.bf16.msra.mxu0 0
    %146 = vmatprep.subr.bf16.mxu0 0
    %147 = vmatpush2.bf16.msra.mxu0 0
    %148 = vmatprep.subr.bf16.mxu0 0
    %149 = vmatpush2.bf16.msra.mxu0 0
    %150 = vmatprep.subr.bf16.mxu0 0
    %151 = vmatpush2.bf16.msra.mxu0 0
    %152 = vmatprep.subr.bf16.mxu0 0
    %153 = vmatpush2.bf16.msra.mxu0 0
    %154 = vmatprep.mubr.bf16.mxu0 0
    %155 = vmatmul.mubr.bf16.gmra.mxu0 %v120
    %v156 = vpop.f32.mrf.mxu0
    %v157 = vadd.f32 %v76, %v156
    %v158 = vpop.f32.mrf.mxu0
    %v159 = vadd.f32 %v80, %v158
    %v160 = vpop.f32.mrf.mxu0
    %v161 = vadd.f32 %v76, %v160
    %v162 = vpop.f32.mrf.mxu0
    %v163 = vadd.f32 %v80, %v162
    %164 = vdwg.mxu0
    %165 = vmatprep.subr.bf16.mxu0 0
    %166 = vmatpush1.bf16.msra.mxu0 0
    %167 = vmatprep.subr.bf16.mxu0 0
    %168 = vmatpush1.bf16.msra.mxu0 0
    %169 = vmatprep.subr.bf16.mxu0 0
    %170 = vmatpush1.bf16.msra.mxu0 0
    %171 = vmatprep.subr.bf16.mxu0 0
    %172 = vmatpush1.bf16.msra.mxu0 0
    %173 = vmatprep.subr.bf16.mxu0 0
    %174 = vmatpush1.bf16.msra.mxu0 0
    %175 = vmatprep.subr.bf16.mxu0 0
    %176 = vmatpush1.bf16.msra.mxu0 0
    %177 = vmatprep.subr.bf16.mxu0 0
    %178 = vmatpush1.bf16.msra.mxu0 0
    %179 = vmatprep.subr.bf16.mxu0 %v113
    %180 = vmatpush1.bf16.msra.mxu0 %v112
    %181 = vmatprep.subr.bf16.mxu0 0
    %182 = vmatpush2.bf16.msra.mxu0 0
    %183 = vmatprep.subr.bf16.mxu0 0
    %184 = vmatpush2.bf16.msra.mxu0 0
    %185 = vmatprep.subr.bf16.mxu0 0
    %186 = vmatpush2.bf16.msra.mxu0 0
    %187 = vmatprep.subr.bf16.mxu0 0
    %188 = vmatpush2.bf16.msra.mxu0 0
    %189 = vmatprep.subr.bf16.mxu0 0
    %190 = vmatpush2.bf16.msra.mxu0 0
    %191 = vmatprep.subr.bf16.mxu0 0
    %192 = vmatpush2.bf16.msra.mxu0 0
    %193 = vmatprep.subr.bf16.mxu0 0
    %194 = vmatpush2.bf16.msra.mxu0 0
    %195 = vmatprep.subr.bf16.mxu0 0
    %196 = vmatpush2.bf16.msra.mxu0 0
    %197 = vmatprep.mubr.bf16.mxu0 0
    %198 = vmatmul.mubr.bf16.gmra.mxu0 %v120
    %v199 = vpop.f32.mrf.mxu0
    %v200 = vadd.f32 %v84, %v199
    %v201 = vpop.f32.mrf.mxu0
    %v202 = vadd.f32 %v88, %v201
    %v203 = vpop.f32.mrf.mxu0
    %v204 = vadd.f32 %v84, %v203
    %v205 = vpop.f32.mrf.mxu0
    %v206 = vadd.f32 %v88, %v205
    %207 = vdwg.mxu0
    %v208 = vtanh.pop %v157
    %v209 = vtanh.pop %v159
    %v210 = vtanh.pop %v161
    %v211 = vtanh.pop %v163
    %v212 = vxor.u32 %v200, 2147483648
    %v213 = vxor.u32 %v202, 2147483648
    %v214 = vxor.u32 %v204, 2147483648
    %v215 = vxor.u32 %v206, 2147483648
    %v216 = vmul.f32 %v212, 1.442695
    %v217 = vpow.pop %v216
    %v218 = vmul.f32 %v213, 1.442695
    %v219 = vpow.pop %v218
    %v220 = vmul.f32 %v214, 1.442695
    %v221 = vpow.pop %v220
    %v222 = vmul.f32 %v215, 1.442695
    %v223 = vpow.pop %v222
    %v224 = vadd.f32 %v217, 1.0
    %v225 = vadd.f32 %v219, 1.0
    %v226 = vadd.f32 %v221, 1.0
    %v227 = vadd.f32 %v223, 1.0
    %v228 = vrcp.pop %v224
    %v229 = vmul.f32 1.0, %v228
    %v230 = vrcp.pop %v225
    %v231 = vmul.f32 1.0, %v230
    %v232 = vrcp.pop %v226
    %v233 = vmul.f32 1.0, %v232
    %v234 = vrcp.pop %v227
    %v235 = vmul.f32 1.0, %v234
    %v236 = vmul.f32 %v208, %v229
    %v237 = vmul.f32 %v209, %v231
    %v238 = vmul.f32 %v210, %v233
    %v239 = vmul.f32 %v211, %v235
    %v240 = vld [vmem:[#allocation8] sm:$0x3]
    %v241 = vld [vmem:[#allocation8 + $0x2] sm:$0x3]
    %v244 = vlaneseq
    %v245 = vshrl.u32 %v244, 7
    %v246 = vsub.s32 0, %v245
    %v247 = vrot.slane %v240, %v246
    %v248 = vlaneseq
    %v249 = vshrl.u32 %v248, 7
    %v250 = vsub.s32 1, %v249
    %v251 = vrot.slane %v240, %v250
    %v252 = vlaneseq
    %v253 = vshrl.u32 %v252, 7
    %v254 = vsub.s32 0, %v253
    %v255 = vrot.slane %v241, %v254
    %v256 = vlaneseq
    %v257 = vshrl.u32 %v256, 7
    %v258 = vsub.s32 1, %v257
    %v259 = vrot.slane %v241, %v258
    %v264 = vmul.f32 %v236, %v247
    %v265 = vmul.f32 %v237, %v251
    %v266 = vmul.f32 %v238, %v255
    %v267 = vmul.f32 %v239, %v259
    %v268 = vadd.f32 %v264, %v265
    %269 = vadd.xlane.f32.xlu0 %v268
    %v270 = vpop.xlane.xlu0 %269
    %v271 = vadd.f32 %v266, %v267
    %272 = vadd.xlane.f32.xlu0 %v271
    %v273 = vpop.xlane.xlu0 %272
    %v274 = vld [vmem:[#allocation2] sm:$0x1]
    %v276 = vlaneseq
    %v277 = vshrl.u32 %v276, 7
    %v278 = vsub.s32 0, %v277
    %v279 = vrot.slane %v274, %v278
    %280 = vset.pattern.permute.xlu0 0
    %281 = vperm.xlu0 %280, %v279
    %v282 = vpop.permute.xlu0 %281
    %v284 = vadd.f32 %v270, %v282
    %v285 = vadd.f32 %v273, %v282
    %v288 = vlaneseq
    %v289 = vand.u32 %v288, 127
    %v290 = vlaneseq
    %v291 = vshrl.u32 %v290, 7
    %v292 = vsub.s32 %v289, %v291
    %v293 = vrot.slane %v284, %v292
    %v294 = vlaneseq
    %v295 = vshrl.u32 %v294, 7
    %v296 = vsub.s32 %v289, %v295
    %v297 = vrot.slane %v285, %v296
    %vm298 = vcmask 1041409
    %v299 = vsel %vm298, %v297, %v293
    %vm301 = vcmask 58368
    %v302 = vsel %vm301, %v299, -inf
    %303 = vmax.xlane.f32.xlu0 %v302
    %v304 = vpop.xlane.xlu0 %303
    %v306 = vlaneseq
    %v307 = vshrl.u32 %v306, 7
    %v308 = vsub.s32 0, %v307
    %v309 = vrot.slane %v304, %v308
    %v310 = vlaneseq
    %v311 = vshrl.u32 %v310, 7
    %v312 = vsub.s32 1, %v311
    %v313 = vrot.slane %v304, %v312
    %v316 = vsub.f32 %v284, %v309
    %v317 = vsub.f32 %v285, %v313
    %v318 = vmul.f32 %v316, 1.442695
    %v319 = vpow.pop %v318
    %v320 = vmul.f32 %v317, 1.442695
    %v321 = vpow.pop %v320
    %324 = vset.pattern.permute.xlu0 0
    %325 = vperm.xlu0 %324, %v319
    %v326 = vpop.permute.xlu0 %325
    %327 = vset.pattern.permute.xlu0 0
    %328 = vperm.xlu0 %327, %v321
    %v329 = vpop.permute.xlu0 %328
    %v330 = vlaneseq
    %v331 = vshrl.u32 %v330, 7
    %v332 = vsub.s32 %v289, %v331
    %v333 = vrot.slane %v326, %v332
    %v334 = vlaneseq
    %v335 = vshrl.u32 %v334, 7
    %v336 = vsub.s32 %v289, %v335
    %v337 = vrot.slane %v329, %v336
    %v338 = vsel %vm298, %v337, %v333
    %v340 = vsel %vm301, %v338, 0.0
    %341 = vadd.xlane.f32.xlu0 %v340
    %v342 = vpop.xlane.xlu0 %341
    %v343 = vrcp.pop %v342
    %v345 = vlaneseq
    %v346 = vshrl.u32 %v345, 7
    %v347 = vsub.s32 0, %v346
    %v348 = vrot.slane %v343, %v347
    %v349 = vlaneseq
    %v350 = vshrl.u32 %v349, 7
    %v351 = vsub.s32 1, %v350
    %v352 = vrot.slane %v343, %v351
    %v355 = vmul.f32 %v319, %v348
    %v356 = vmul.f32 %v321, %v352
    %358 = vset.pattern.permute.xlu0 0
    %359 = vperm.xlu0 %358, %v355
    %v360 = vpop.permute.xlu0 %359
    %363 = vset.pattern.permute.xlu0 0
    %364 = vperm.xlu0 %363, %v356
    %v365 = vpop.permute.xlu0 %364
    %367 = vst.msk [vmem:[#allocation9] sm:$0xff] %vm118, %v360
    %368 = vst.msk [vmem:[#allocation9 + $0x8] sm:$0xff] %vm118, %v365
    // Predicated region
    $region34: #{tpu_custom_call.1} parent=1 // pred_check
      _
    $region35: #{tpu_custom_call.1} parent=1 // pred_check_branch
      %370 = sbr.rel (0) target = $region37
    $region36: #{tpu_custom_call.1} parent=1 // pred_region
      %s372 = ssub.s32 256, 256
      %373 = vsyncadd [#allocation5], %s372
      %s374 = sshll.u32 [#allocation9], 4
      %s375 = int_to_ptr.vmem [resolvable:$true] %s374
      %380 = dma.vmem_to_hbm [thread:$0]  %s375, 256, %s5, [#allocation5], 128, 128, 8
    $region37: #{tpu_custom_call.1} parent=1 // pred_fallthru
      _
    // Predicated region
    $region38: #{tpu_custom_call.1} parent=1 // pred_check
      _
    $region39: #{tpu_custom_call.1} parent=1 // pred_check_branch
      %382 = sbr.rel (0) target = $region41
    $region40: #{tpu_custom_call.1} parent=1 // pred_region
      %383 = dma.done [#allocation5], 256
    $region41: #{tpu_custom_call.1} parent=1 // pred_fallthru
      _
    %384 = vsyncpa [#allocation4], 1
    %385 = vsyncpa [#allocation7], 1
    %386 = vsyncpa [#allocation5], 1

</llo_original>
